<compile_context>
chip_gen: v5e
topology: v5e:2x2
jax: 0.10.0
libtpu: 0.0.40
codegen_flags: <defaults>
</compile_context>

<pallas_src>
import functools
import math

import jax
import jax.numpy as jnp
from jax.experimental import pallas as pl
from jax.experimental.pallas import tpu as pltpu


def _round_up(x, m):
    return ((x + m - 1) // m) * m


# ---------------------------------------------------------------------------
# Content loss: MSE (mean reduction) between two equally-shaped tensors.
# ---------------------------------------------------------------------------
def _mse_partial_kernel(a_ref, b_ref, out_ref):
    # a_ref/b_ref: (TR, 128) tile, original dtype. Cast to f32 on the VPU.
    d = a_ref[...].astype(jnp.float32) - b_ref[...].astype(jnp.float32)
    d2 = d * d
    tr = d2.shape[0]
    # Reduce to one (8,128) vreg worth of per-lane partial sums (sublane-group sum,
    # pure VPU adds; no lane crossing). Final scalar reduction happens in JAX.
    partial = jnp.sum(d2.reshape(tr // 8, 8, 128), axis=0)
    out_ref[...] = partial.reshape(1, 8, 128)


def mse_mean(a, b):
    assert a.shape == b.shape
    n = a.size
    lane = 128
    rows = (n + lane - 1) // lane
    tile_rows = min(512, _round_up(rows, 8))        # <= 512*128*4B = 256 KiB / block
    rows_padded = _round_up(rows, tile_rows)
    num_tiles = rows_padded // tile_rows
    padded = rows_padded * lane

    a_flat = a.reshape(-1)
    b_flat = b.reshape(-1)
    if padded != n:                                  # zero padding -> diff is 0, sum unaffected
        a_flat = jnp.pad(a_flat, (0, padded - n))
        b_flat = jnp.pad(b_flat, (0, padded - n))
    a2 = a_flat.reshape(rows_padded, lane)
    b2 = b_flat.reshape(rows_padded, lane)

    out = pl.pallas_call(
        _mse_partial_kernel,
        out_shape=jax.ShapeDtypeStruct((num_tiles, 8, lane), jnp.float32),
        grid=(num_tiles,),
        in_specs=[pl.BlockSpec((tile_rows, lane), lambda i: (i, 0)),
                  pl.BlockSpec((tile_rows, lane), lambda i: (i, 0))],
        out_specs=pl.BlockSpec((1, 8, lane), lambda i: (i, 0, 0)),
        compiler_params=pltpu.CompilerParams(dimension_semantics=("parallel",)),
    )(a2, b2)
    return jnp.sum(out) / n


# ---------------------------------------------------------------------------
# Style loss:
#   per-batch: Gram = f f^T / (C*N) (uncentered, matches torch.bmm version),
#   per-channel mean; loss = sum((mean_t - mean_s)^2) + sum((Gram_t - Gram_s)^2),
#   summed over batch and divided by B.
# ---------------------------------------------------------------------------
def _style_loss_kernel(t_ref, s_ref, out_ref, tg_ref, sg_ref, ts_ref, ss_ref,
                       *, inv_n, inv_cn):
    k = pl.program_id(1)
    nk = pl.num_programs(1)

    @pl.when(k == 0)
    def _():
        tg_ref[...] = jnp.zeros_like(tg_ref)
        sg_ref[...] = jnp.zeros_like(sg_ref)
        ts_ref[...] = jnp.zeros_like(ts_ref)
        ss_ref[...] = jnp.zeros_like(ss_ref)

    tf = t_ref[0]                       # (C, TN) in the original HBM dtype
    sf = s_ref[0]
    dn = (((1,), (1,)), ((), ()))       # contract on the N axis -> (C, C)
    tg_ref[...] += jax.lax.dot_general(tf, tf, dn, preferred_element_type=jnp.float32)
    sg_ref[...] += jax.lax.dot_general(sf, sf, dn, preferred_element_type=jnp.float32)
    ts_ref[...] += jnp.sum(tf.astype(jnp.float32), axis=1, keepdims=True)   # (C, 1)
    ss_ref[...] += jnp.sum(sf.astype(jnp.float32), axis=1, keepdims=True)

    @pl.when(k == nk - 1)
    def _():
        dm = (ts_ref[...] - ss_ref[...]) * inv_n      # mean diff, (C, 1)
        dc = (tg_ref[...] - sg_ref[...]) * inv_cn     # Gram diff, (C, C)
        out_ref[...] = (jnp.sum(dm * dm) + jnp.sum(dc * dc)).reshape(1, 1, 1)


def _choose_tn(n, cap=1024):
    """Largest multiple-of-128 divisor of n (capped); full n if not 128-aligned."""
    if n % 128 != 0:
        return n
    best = 128
    c = 128
    while c <= min(n, cap):
        if n % c == 0:
            best = c
        c += 128
    return best


def style_loss(t_feat, s_feat):
    B, C, H, W = t_feat.shape
    N = H * W
    tn = _choose_tn(N)                 # N-chunk; keeps each block <= a few MiB
    nk = N // tn
    tf = t_feat.reshape(B, C, N)       # keep HBM dtype (bf16 stays bf16 for the MXU)
    sf = s_feat.reshape(B, C, N)
    inv_n = 1.0 / float(N)
    inv_cn = 1.0 / float(C * N)

    out = pl.pallas_call(
        functools.partial(_style_loss_kernel, inv_n=inv_n, inv_cn=inv_cn),
        out_shape=jax.ShapeDtypeStruct((B, 1, 1), jnp.float32),
        grid=(B, nk),
        in_specs=[pl.BlockSpec((1, C, tn), lambda b, k: (b, 0, k)),
                  pl.BlockSpec((1, C, tn), lambda b, k: (b, 0, k))],
        out_specs=pl.BlockSpec((1, 1, 1), lambda b, k: (b, 0, 0)),
        scratch_shapes=[pltpu.VMEM((C, C), jnp.float32),
                        pltpu.VMEM((C, C), jnp.float32),
                        pltpu.VMEM((C, 1), jnp.float32),
                        pltpu.VMEM((C, 1), jnp.float32)],
        compiler_params=pltpu.CompilerParams(
            dimension_semantics=("parallel", "arbitrary")),
    )(tf, sf)
    return jnp.sum(out) / B


# ---------------------------------------------------------------------------
# Edge loss: rgb->gray, 3x3 Gaussian blur (sigma=0.5, reflect pad),
# 3x3 Laplacian conv (zero pad), MSE (mean) between the two edge maps.
# Grayscale + reflect padding happen inside the kernel (no XLA-side padded copy).
# ---------------------------------------------------------------------------
def _edge_loss_kernel(a_ref, b_ref, out_ref, *, gw0, gw1):
    def edge_map(ref):
        r = ref[0, 0].astype(jnp.float32)
        g = ref[0, 1].astype(jnp.float32)
        bch = ref[0, 2].astype(jnp.float32)
        gray = 0.2989 * r + 0.587 * g + 0.114 * bch            # (H, W)
        h, w = gray.shape

        # --- separable 3-tap Gaussian, reflect boundary (matches torchvision) ---
        gcol = jnp.concatenate([gray[:, 1:2], gray, gray[:, w - 2:w - 1]], axis=1)
        hblur = gw1 * gcol[:, 1:w + 1] + gw0 * (gcol[:, 0:w] + gcol[:, 2:w + 2])
        grow = jnp.concatenate([hblur[1:2, :], hblur, hblur[h - 2:h - 1, :]], axis=0)
        blurred = gw1 * grow[1:h + 1, :] + gw0 * (grow[0:h, :] + grow[2:h + 2, :])

        # --- 3x3 Laplacian [[0,1,0],[1,-4,1],[0,1,0]], zero padding:
        #     single zero-pad of `blurred` + 4 shifted slices ---
        zc = jnp.zeros((h, 1), jnp.float32)
        zr = jnp.zeros((1, w + 2), jnp.float32)
        zp = jnp.concatenate([zc, blurred, zc], axis=1)         # (H, W+2)
        zp = jnp.concatenate([zr, zp, zr], axis=0)              # (H+2, W+2)
        return (zp[0:h, 1:w + 1] + zp[2:h + 2, 1:w + 1]
                + zp[1:h + 1, 0:w] + zp[1:h + 1, 2:w + 2] - 4.0 * blurred)

    d = edge_map(b_ref) - edge_map(a_ref)
    out_ref[...] = jnp.sum(d * d).reshape(1, 1, 1)


def edge_loss(input_img, output_img):
    B, C3, H, W = input_img.shape
    assert C3 == 3
    # torchvision GaussianBlur(kernel_size=3, sigma=0.5) 1D weights.
    e = math.exp(-0.5 * (1.0 / 0.5) ** 2)
    s = 1.0 + 2.0 * e
    gw0, gw1 = e / s, 1.0 / s

    # TODO(synk): for >~1 MP images, tile over H in row strips with a 2-row halo
    # (manual make_async_copy) so 2 inputs x 2 buffers stay within the 32 MiB
    # default scoped VMEM (and v7x's 64 MiB physical VMEM).
    out = pl.pallas_call(
        functools.partial(_edge_loss_kernel, gw0=gw0, gw1=gw1),
        out_shape=jax.ShapeDtypeStruct((B, 1, 1), jnp.float32),
        grid=(B,),
        in_specs=[pl.BlockSpec((1, 3, H, W), lambda i: (i, 0, 0, 0)),
                  pl.BlockSpec((1, 3, H, W), lambda i: (i, 0, 0, 0))],
        out_specs=pl.BlockSpec((1, 1, 1), lambda i: (i, 0, 0)),
        compiler_params=pltpu.CompilerParams(dimension_semantics=("parallel",)),
    )(input_img, output_img)
    # F.mse_loss default reduction='mean' over (B, 1, H, W)
    return jnp.sum(out) / (B * H * W)


# ---------------------------------------------------------------------------
# LossCriterion wrapper (no learnable parameters).
# ---------------------------------------------------------------------------
class LossCriterion:
    def __init__(self, style_layers, content_layers, style_weight,
                 content_weight, edge_weight=1.0):
        self.style_layers = style_layers
        self.content_layers = content_layers
        self.style_weight = style_weight
        self.content_weight = content_weight
        self.edge_weight = edge_weight

    def __call__(self, tF, sF, cF, input_img=None, output_img=None):
        # TODO(synk): layers with identical shapes could be batched into a single
        # pallas_call (extra grid axis) to amortize launch/pipeline-ramp overhead.
        total_content = jnp.float32(0.0)
        for layer in self.content_layers:
            total_content = total_content + mse_mean(tF[layer], cF[layer])
        total_content = total_content * self.content_weight

        total_style = jnp.float32(0.0)
        for layer in self.style_layers:
            total_style = total_style + style_loss(tF[layer], sF[layer])
        total_style = total_style * self.style_weight

        if input_img is not None and output_img is not None:
            e_loss = edge_loss(input_img, output_img) * self.edge_weight
        else:
            e_loss = jnp.float32(0.0)

        loss = total_content + total_style + e_loss
        return loss, total_style, total_content, e_loss


if __name__ == "__main__":
    key = jax.random.PRNGKey(0)
    ks = jax.random.split(key, 9)

    B = 2
    style_layers = ["r11", "r21"]
    content_layers = ["r41"]
    shapes = {"r11": (B, 4, 16, 16), "r21": (B, 8, 8, 8), "r41": (B, 8, 8, 8)}
    names = ["r11", "r21", "r41"]

    tF = {n: jax.random.normal(ks[i], shapes[n], jnp.float32) for i, n in enumerate(names)}
    sF = {n: jax.random.normal(ks[3 + i], shapes[n], jnp.float32) for i, n in enumerate(names)}
    cF = {"r41": jax.random.normal(ks[6], shapes["r41"], jnp.float32)}

    input_img = jax.random.uniform(ks[7], (B, 3, 16, 16), jnp.float32)
    output_img = jax.random.uniform(ks[8], (B, 3, 16, 16), jnp.float32)

    crit = LossCriterion(style_layers, content_layers,
                         style_weight=0.02, content_weight=1.0, edge_weight=1.0)
    loss, style_l, content_l, edge_l = crit(tF, sF, cF, input_img, output_img)
    jax.block_until_ready((loss, style_l, content_l, edge_l))
    print("KERNEL_OK")
</pallas_src>

<mosaic_0001>
module attributes {stable_mosaic.version = 11 : i64} {
  func.func @_mse_partial_kernel(%arg0: i32, %arg1: memref<8x128xf32, #tpu.memory_space<vmem>>, %arg2: memref<8x128xf32, #tpu.memory_space<vmem>>, %arg3: memref<1x8x128xf32, #tpu.memory_space<vmem>>) attributes {dimension_semantics = [#tpu.dimension_semantics<parallel>], iteration_bounds = array<i64: 1>, scalar_prefetch = 0 : i64, scratch_operands = 0 : i64, tpu.core_type = #tpu.core_type<tc>, window_params = [{transform_indices = @transform_0, window_bounds = array<i64: 8, 128>}, {transform_indices = @transform_1, window_bounds = array<i64: 8, 128>}, {transform_indices = @transform_2, window_bounds = array<i64: 1, 8, 128>}]} {
    %c0 = arith.constant 0 : index
    %c0_0 = arith.constant 0 : index
    %0 = vector.load %arg1[%c0, %c0_0] : memref<8x128xf32, #tpu.memory_space<vmem>>, vector<8x128xf32>
    %c0_1 = arith.constant 0 : index
    %c0_2 = arith.constant 0 : index
    %1 = vector.load %arg2[%c0_1, %c0_2] : memref<8x128xf32, #tpu.memory_space<vmem>>, vector<8x128xf32>
    %2 = arith.subf %0, %1 : vector<8x128xf32>
    %3 = arith.mulf %2, %2 : vector<8x128xf32>
    %4 = vector.shape_cast %3 : vector<8x128xf32> to vector<1x8x128xf32>
    %cst = arith.constant dense<0.000000e+00> : vector<8x128xf32>
    %5 = vector.multi_reduction <add>, %4, %cst [0] : vector<1x8x128xf32> to vector<8x128xf32>
    %6 = vector.shape_cast %5 : vector<8x128xf32> to vector<1x8x128xf32>
    %c0_3 = arith.constant 0 : index
    %c0_4 = arith.constant 0 : index
    %c0_5 = arith.constant 0 : index
    %7 = vector.load %arg3[%c0_3, %c0_4, %c0_5] : memref<1x8x128xf32, #tpu.memory_space<vmem>>, vector<1x8x128xf32>
    tpu.vector_store %arg3[%c0_3, %c0_4, %c0_5], %6 {strides = array<i32>} : memref<1x8x128xf32, #tpu.memory_space<vmem>>, vector<1x8x128xf32>,
    return
  }
  func.func @transform_0(%arg0: i32) -> (i32, i32) {
    %c0_i32 = arith.constant 0 : i32
    %c0_i32_0 = arith.constant 0 : i32
    return %arg0, %c0_i32 : i32, i32
  }
  func.func @transform_1(%arg0: i32) -> (i32, i32) {
    %c0_i32 = arith.constant 0 : i32
    %c0_i32_0 = arith.constant 0 : i32
    return %arg0, %c0_i32 : i32, i32
  }
  func.func @transform_2(%arg0: i32) -> (i32, i32, i32) {
    %c0_i32 = arith.constant 0 : i32
    %c0_i32_0 = arith.constant 0 : i32
    %c0_i32_1 = arith.constant 0 : i32
    return %arg0, %c0_i32, %c0_i32_0 : i32, i32, i32
  }
}

</mosaic_0001>

<llo_original>
// kernel: tpu_custom_call.1
$region0: #{tpu_custom_call.1}
  #allocation0 [shape = 'u32[]', space=smem, size = 0x4, offset = 0x4, fixed_abs, tag = 'smem constant byte address 0x4 - core index']
  #allocation1 [shape = 'u32[72,128]{1,0:T(1,128)}', space=vmem, size = 0x9000, scoped, tag = 'internal scratch']
  %s0 = inlined_call_operand.hbm [shape: f32[8,128], index: 0, kind: input, shape index: {}]
  %s1 = inlined_call_operand.hbm [shape: f32[8,128], index: 1, kind: input, shape index: {}]
  %s2 = inlined_call_operand.hbm [shape: f32[1,8,128], index: 2, kind: output, shape index: {}]
  %s3 = sld [smem:[#allocation0]]
  $region26: #{tpu_custom_call.1} parent=0
    _
  %s5 = ssub.s32 1, %s3
  %s6 = scalar_select 0, %s5, %s3
  $region1: #{tpu_custom_call.1} parent=0
    #allocation2 [shape = 'u8[4096]{0}', space=vmem, size = 0x1000, scoped, tag = 'input window, operand 0, single buffered']
    #allocation3 [shape = 's32[1]{0}', space=sflag, size = 0x4, scoped, tag = 'scoped memory for tpu_custom_call.1']
    #allocation4 [shape = 's32[1]{0}', space=sflag, size = 0x4, scoped, tag = 'scoped memory for tpu_custom_call.1']
    #allocation5 [shape = 'u8[4096]{0}', space=vmem, size = 0x1000, scoped, tag = 'input window, operand 1, single buffered']
    #allocation6 [shape = 's32[1]{0}', space=sflag, size = 0x4, scoped, tag = 'scoped memory for tpu_custom_call.1']
    #allocation7 [shape = 'u8[4096]{0}', space=vmem, size = 0x1000, scoped, tag = 'output window, operand 0, single buffered']
    %7 = vsyncpa [#allocation3], 0
    %8 = vsyncpa [#allocation6], 0
    %9 = vsyncpa [#allocation4], 0
    // Predicated region
    $region2: #{tpu_custom_call.1} parent=1 // pred_check
      _
    $region3: #{tpu_custom_call.1} parent=1 // pred_check_branch
      %11 = sbr.rel (0) target = $region5
    $region4: #{tpu_custom_call.1} parent=1 // pred_region
      %13 = vsyncadd [#allocation3], 0
      %s15 = sshll.u32 %s0, 4
      %s16 = int_to_ptr.hbm [resolvable:$true] %s15
      %s17 = sshll.u32 [#allocation2], 4
      %s18 = int_to_ptr.vmem [resolvable:$true] %s17
      %20 = dma.hbm_to_vmem [thread:$0]  %s16, 128, %s18, [#allocation3]
    $region5: #{tpu_custom_call.1} parent=1 // pred_fallthru
      _
    // Predicated region
    $region6: #{tpu_custom_call.1} parent=1 // pred_check
      _
    $region7: #{tpu_custom_call.1} parent=1 // pred_check_branch
      %22 = sbr.rel (0) target = $region9
    $region8: #{tpu_custom_call.1} parent=1 // pred_region
      %24 = vsyncadd [#allocation6], 0
      %s26 = sshll.u32 %s1, 4
      %s27 = int_to_ptr.hbm [resolvable:$true] %s26
      %s28 = sshll.u32 [#allocation5], 4
      %s29 = int_to_ptr.vmem [resolvable:$true] %s28
      %31 = dma.hbm_to_vmem [thread:$0]  %s27, 128, %s29, [#allocation6]
    $region9: #{tpu_custom_call.1} parent=1 // pred_fallthru
      _
    // Predicated region
    $region10: #{tpu_custom_call.1} parent=1 // pred_check
      _
    $region11: #{tpu_custom_call.1} parent=1 // pred_check_branch
      %33 = sbr.rel (0) target = $region13
    $region12: #{tpu_custom_call.1} parent=1 // pred_region
      %35 = dma.done [#allocation3], 128
    $region13: #{tpu_custom_call.1} parent=1 // pred_fallthru
      _
    // Predicated region
    $region14: #{tpu_custom_call.1} parent=1 // pred_check
      _
    $region15: #{tpu_custom_call.1} parent=1 // pred_check_branch
      %37 = sbr.rel (0) target = $region17
    $region16: #{tpu_custom_call.1} parent=1 // pred_region
      %39 = dma.done [#allocation6], 128
    $region17: #{tpu_custom_call.1} parent=1 // pred_fallthru
      _
    %v40 = vld [vmem:[#allocation2] sm:$0xff]
    %v41 = vld [vmem:[#allocation5] sm:$0xff]
    %v42 = vsub.f32 %v40, %v41
    %v43 = vmul.f32 %v42, %v42
    %v44 = vadd.f32 %v43, 0.0
    %45 = vst [vmem:[#allocation7] sm:$0xff] %v44
    // Predicated region
    $region18: #{tpu_custom_call.1} parent=1 // pred_check
      _
    $region19: #{tpu_custom_call.1} parent=1 // pred_check_branch
      %47 = sbr.rel (0) target = $region21
    $region20: #{tpu_custom_call.1} parent=1 // pred_region
      %49 = vsyncadd [#allocation4], 0
      %s51 = sshll.u32 [#allocation7], 4
      %s52 = int_to_ptr.vmem [resolvable:$true] %s51
      %s53 = sshll.u32 %s2, 4
      %s54 = int_to_ptr.hbm [resolvable:$true] %s53
      %56 = dma.vmem_to_hbm [thread:$0]  %s52, 128, %s54, [#allocation4]
    $region21: #{tpu_custom_call.1} parent=1 // pred_fallthru
      _
    // Predicated region
    $region22: #{tpu_custom_call.1} parent=1 // pred_check
      _
    $region23: #{tpu_custom_call.1} parent=1 // pred_check_branch
      %58 = sbr.rel (0) target = $region25
    $region24: #{tpu_custom_call.1} parent=1 // pred_region
      %60 = dma.done [#allocation4], 128
    $region25: #{tpu_custom_call.1} parent=1 // pred_fallthru
      _
    %61 = vsyncpa [#allocation3], 1
    %62 = vsyncpa [#allocation6], 1
    %63 = vsyncpa [#allocation4], 1

</llo_original>
